<compile_context>
chip_gen: v6e
topology: v6e:2x2x1
jax: 0.10.0
libtpu: 0.0.40
codegen_flags: <defaults>
</compile_context>

<pallas_src>
import math
import jax
import jax.numpy as jnp
from jax.experimental import pallas as pl
from jax.experimental.pallas import tpu as pltpu

INPUT_DIM = 13          # Reacher-v2 (fully_observable / default path)
HIDDEN_DIMS = (128, 64)
NEG_SLOPE = 0.01        # F.leaky_relu default


def _leaky_relu(x):
    # 2 VPU ops (mul + max) instead of 3 (cmp + mul + select); valid for slope < 1.
    return jnp.maximum(x, NEG_SLOPE * x)


def _mlp_kernel(x_ref, w1_ref, b1_ref, w2_ref, b2_ref, w3_ref, o_ref):
    # x_ref : (TB, 13) f32, natural batch-major block (last tile may be partial)
    # w1_ref: (128, 13) bf16   b1_ref: (128, 1) f32
    # w2_ref: (64, 128) bf16   b2_ref: (64, 1)  f32
    # w3_ref: (64, 1)   f32    (final layer, bias=False)
    # o_ref : (1, TB)   f32 logits, lane-dense over batch
    xt = x_ref[...].T.astype(jnp.bfloat16)                                   # (13, TB), XLU
    h1 = jnp.dot(w1_ref[...], xt, preferred_element_type=jnp.float32)        # (128, TB)
    h1 = _leaky_relu(h1 + b1_ref[...])                                       # lane-bcast bias, f32
    h2 = jnp.dot(w2_ref[...], h1.astype(jnp.bfloat16),
                 preferred_element_type=jnp.float32)                         # (64, TB)
    h2 = _leaky_relu(h2 + b2_ref[...])
    # Final 64 -> 1 projection on the VPU + XLU (sublane reduce); MXU stays free.
    logit = jnp.sum(h2 * w3_ref[...], axis=0, keepdims=True)                 # (1, TB)
    o_ref[...] = logit.astype(o_ref.dtype)


def _round_up(n, m):
    return -(-n // m) * m


def prepare_params(params):
    """One-time weight prep (hoisted out of the per-call path): bf16 MXU operands."""
    W1, b1, W2, b2, W3 = params
    return (W1.astype(jnp.bfloat16), b1.astype(jnp.float32),
            W2.astype(jnp.bfloat16), b2.astype(jnp.float32),
            W3.astype(jnp.float32))


def discriminator_forward(x, prep_params, *, block_b=4096):
    """x: (B, INPUT_DIM) float32 -> logits (B, 1) float32."""
    W1, b1, W2, b2, W3 = prep_params
    B, D = x.shape
    assert D == INPUT_DIM, D

    # Batch tile: as large as block_b permits (amortizes per-grid-step overhead) but
    # split into >=2 tiles whenever the batch allows, so v7x's two TensorCores both
    # get work on the ("parallel",) axis.  Always a multiple of 128 (lane width).
    Bp = _round_up(B, 128)
    TB = min(int(block_b), Bp)
    if Bp >= 2 * 128 and Bp // TB < 2:
        TB = _round_up(-(-Bp // 2), 128)
    TB = max(_round_up(TB, 128), 128)
    ntiles = -(-B // TB)

    flops = 2 * B * (INPUT_DIM * HIDDEN_DIMS[0]
                     + HIDDEN_DIMS[0] * HIDDEN_DIMS[1] + HIDDEN_DIMS[1])
    bytes_accessed = int(B * (INPUT_DIM + 1) * 4
                         + (W1.size + W2.size) * 2
                         + (b1.size + b2.size + W3.size) * 4)

    out = pl.pallas_call(
        _mlp_kernel,
        out_shape=jax.ShapeDtypeStruct((1, B), jnp.float32),
        grid_spec=pltpu.PrefetchScalarGridSpec(
            num_scalar_prefetch=0,
            grid=(ntiles,),
            in_specs=[
                pl.BlockSpec((TB, D), lambda i: (i, 0)),     # x: natural layout, pipelined
                pl.BlockSpec(W1.shape, lambda i: (0, 0)),    # weights/biases: VMEM-resident
                pl.BlockSpec(b1.shape, lambda i: (0, 0)),
                pl.BlockSpec(W2.shape, lambda i: (0, 0)),
                pl.BlockSpec(b2.shape, lambda i: (0, 0)),
                pl.BlockSpec(W3.shape, lambda i: (0, 0)),
            ],
            out_specs=pl.BlockSpec((1, TB), lambda i: (0, i)),
        ),
        compiler_params=pltpu.CompilerParams(
            dimension_semantics=("parallel",),   # megacore shard on v7x; harmless elsewhere
        ),
        cost_estimate=pl.CostEstimate(flops=flops, transcendentals=0,
                                      bytes_accessed=bytes_accessed),
    )(x, W1, b1, W2, b2, W3)

    return out.reshape(B, 1)


def init_params(key):
    """Deterministic init mimicking nn.Linear's U(-1/sqrt(fan_in), 1/sqrt(fan_in)).
    Weights kept in PyTorch (out_features, in_features) orientation; biases as columns."""
    k1, k2, k3, k4, k5 = jax.random.split(key, 5)

    def unif(k, shape, fan_in):
        bound = 1.0 / math.sqrt(fan_in)
        return jax.random.uniform(k, shape, jnp.float32, minval=-bound, maxval=bound)

    W1 = unif(k1, (HIDDEN_DIMS[0], INPUT_DIM), INPUT_DIM)            # fcs[0].weight
    b1 = unif(k2, (HIDDEN_DIMS[0], 1), INPUT_DIM)                    # fcs[0].bias
    W2 = unif(k3, (HIDDEN_DIMS[1], HIDDEN_DIMS[0]), HIDDEN_DIMS[0])  # fcs[1].weight
    b2 = unif(k4, (HIDDEN_DIMS[1], 1), HIDDEN_DIMS[0])               # fcs[1].bias
    W3 = unif(k5, (HIDDEN_DIMS[1], 1), HIDDEN_DIMS[1])               # fcs[2].weight^T, bias=False
    return (W1, b1, W2, b2, W3)


def reference_forward(x, params):
    """Pure-JAX f32 reference matching the PyTorch forward."""
    W1, b1, W2, b2, W3 = params
    h1 = _leaky_relu(x @ W1.T + b1.T)
    h2 = _leaky_relu(h1 @ W2.T + b2.T)
    return h2 @ W3


if __name__ == "__main__":
    key = jax.random.PRNGKey(0)
    kx, kp = jax.random.split(key)
    B = 300                                            # deliberately not a tile multiple
    x = jax.random.normal(kx, (B, INPUT_DIM), jnp.float32)
    params = init_params(kp)
    fwd_params = prepare_params(params)                # one-time bf16 weight casts (hoisted)

    # With the default block_b this yields TB=256 -> 2 grid tiles, last one partial
    # (exercises both the >=2-tile megacore rule and ragged-block handling).
    logit = discriminator_forward(x, fwd_params)
    logit = jax.block_until_ready(logit)

    ref = reference_forward(x, params)
    assert logit.shape == (B, 1), logit.shape
    # bf16 MXU operands with f32 accumulation -> looser tolerance vs the pure-f32 reference.
    max_err = float(jnp.max(jnp.abs(logit - ref)))
    assert jnp.allclose(logit, ref, atol=2e-2, rtol=2e-2), max_err
    print("KERNEL_OK")
</pallas_src>

<mosaic_0001>
module attributes {stable_mosaic.version = 11 : i64} {
  func.func @_mlp_kernel(%arg0: i32, %arg1: memref<256x13xf32, #tpu.memory_space<vmem>>, %arg2: memref<128x13xbf16, #tpu.memory_space<vmem>>, %arg3: memref<128x1xf32, #tpu.memory_space<vmem>>, %arg4: memref<64x128xbf16, #tpu.memory_space<vmem>>, %arg5: memref<64x1xf32, #tpu.memory_space<vmem>>, %arg6: memref<64x1xf32, #tpu.memory_space<vmem>>, %arg7: memref<1x256xf32, #tpu.memory_space<vmem>>) attributes {dimension_semantics = [#tpu.dimension_semantics<parallel>], iteration_bounds = array<i64: 2>, scalar_prefetch = 0 : i64, scratch_operands = 0 : i64, tpu.core_type = #tpu.core_type<tc>, window_params = [{transform_indices = @transform_0, window_bounds = array<i64: 256, 13>}, {pipeline_mode = #tpu.pipeline_mode<synchronous>, transform_indices = @transform_1, window_bounds = array<i64: 128, 13>}, {pipeline_mode = #tpu.pipeline_mode<synchronous>, transform_indices = @transform_2, window_bounds = array<i64: 128, 1>}, {pipeline_mode = #tpu.pipeline_mode<synchronous>, transform_indices = @transform_3, window_bounds = array<i64: 64, 128>}, {pipeline_mode = #tpu.pipeline_mode<synchronous>, transform_indices = @transform_4, window_bounds = array<i64: 64, 1>}, {pipeline_mode = #tpu.pipeline_mode<synchronous>, transform_indices = @transform_5, window_bounds = array<i64: 64, 1>}, {transform_indices = @transform_6, window_bounds = array<i64: 1, 256>}]} {
    %c0 = arith.constant 0 : index
    %c0_0 = arith.constant 0 : index
    %0 = vector.load %arg1[%c0, %c0_0] : memref<256x13xf32, #tpu.memory_space<vmem>>, vector<256x13xf32>
    %1 = tpu.transpose %0, [1, 0] : vector<256x13xf32> -> vector<13x256xf32>
    %2 = arith.truncf %1 : vector<13x256xf32> to vector<13x256xbf16>
    %c0_1 = arith.constant 0 : index
    %c0_2 = arith.constant 0 : index
    %3 = vector.load %arg2[%c0_1, %c0_2] : memref<128x13xbf16, #tpu.memory_space<vmem>>, vector<128x13xbf16>
    %cst = arith.constant dense<0.000000e+00> : vector<128x256xf32>
    %4 = tpu.matmul %3, %2, %cst {dimension_numbers = #tpu.dot_dimension_numbers<[1], [0], [0], [1], [0, 0, 1, 1], [], []>} : vector<128x13xbf16>, vector<13x256xbf16>, vector<128x256xf32> -> vector<128x256xf32>
    %c0_3 = arith.constant 0 : index
    %c0_4 = arith.constant 0 : index
    %5 = vector.load %arg3[%c0_3, %c0_4] : memref<128x1xf32, #tpu.memory_space<vmem>>, vector<128x1xf32>
    %6 = vector.broadcast %5 : vector<128x1xf32> to vector<128x256xf32>
    %7 = arith.addf %4, %6 : vector<128x256xf32>
    %cst_5 = arith.constant 0.00999999977 : f32
    %8 = vector.broadcast %cst_5 : f32 to vector<128x256xf32>
    %9 = arith.mulf %8, %7 : vector<128x256xf32>
    %10 = arith.maximumf %7, %9 : vector<128x256xf32>
    %c0_6 = arith.constant 0 : index
    %c0_7 = arith.constant 0 : index
    %11 = vector.load %arg4[%c0_6, %c0_7] : memref<64x128xbf16, #tpu.memory_space<vmem>>, vector<64x128xbf16>
    %12 = arith.truncf %10 : vector<128x256xf32> to vector<128x256xbf16>
    %cst_8 = arith.constant dense<0.000000e+00> : vector<64x256xf32>
    %13 = tpu.matmul %11, %12, %cst_8 {dimension_numbers = #tpu.dot_dimension_numbers<[1], [0], [0], [1], [0, 0, 1, 1], [], []>} : vector<64x128xbf16>, vector<128x256xbf16>, vector<64x256xf32> -> vector<64x256xf32>
    %c0_9 = arith.constant 0 : index
    %c0_10 = arith.constant 0 : index
    %14 = vector.load %arg5[%c0_9, %c0_10] : memref<64x1xf32, #tpu.memory_space<vmem>>, vector<64x1xf32>
    %15 = vector.broadcast %14 : vector<64x1xf32> to vector<64x256xf32>
    %16 = arith.addf %13, %15 : vector<64x256xf32>
    %cst_11 = arith.constant 0.00999999977 : f32
    %17 = vector.broadcast %cst_11 : f32 to vector<64x256xf32>
    %18 = arith.mulf %17, %16 : vector<64x256xf32>
    %19 = arith.maximumf %16, %18 : vector<64x256xf32>
    %c0_12 = arith.constant 0 : index
    %c0_13 = arith.constant 0 : index
    %20 = vector.load %arg6[%c0_12, %c0_13] : memref<64x1xf32, #tpu.memory_space<vmem>>, vector<64x1xf32>
    %21 = vector.broadcast %20 : vector<64x1xf32> to vector<64x256xf32>
    %22 = arith.mulf %19, %21 : vector<64x256xf32>
    %cst_14 = arith.constant dense<0.000000e+00> : vector<256xf32>
    %23 = vector.multi_reduction <add>, %22, %cst_14 [0] : vector<64x256xf32> to vector<256xf32>
    %24 = vector.shape_cast %23 : vector<256xf32> to vector<1x256xf32>
    %c0_15 = arith.constant 0 : index
    %c0_16 = arith.constant 0 : index
    %25 = vector.load %arg7[%c0_15, %c0_16] : memref<1x256xf32, #tpu.memory_space<vmem>>, vector<1x256xf32>
    tpu.vector_store %arg7[%c0_15, %c0_16], %24 {strides = array<i32>} : memref<1x256xf32, #tpu.memory_space<vmem>>, vector<1x256xf32>,
    return
  }
  func.func @transform_0(%arg0: i32) -> (i32, i32) {
    %c0_i32 = arith.constant 0 : i32
    %c0_i32_0 = arith.constant 0 : i32
    return %arg0, %c0_i32 : i32, i32
  }
  func.func @transform_1(%arg0: i32) -> (i32, i32) {
    %c0_i32 = arith.constant 0 : i32
    %c0_i32_0 = arith.constant 0 : i32
    %c0_i32_1 = arith.constant 0 : i32
    return %c0_i32, %c0_i32_0 : i32, i32
  }
  func.func @transform_2(%arg0: i32) -> (i32, i32) {
    %c0_i32 = arith.constant 0 : i32
    %c0_i32_0 = arith.constant 0 : i32
    %c0_i32_1 = arith.constant 0 : i32
    return %c0_i32, %c0_i32_0 : i32, i32
  }
  func.func @transform_3(%arg0: i32) -> (i32, i32) {
    %c0_i32 = arith.constant 0 : i32
    %c0_i32_0 = arith.constant 0 : i32
    %c0_i32_1 = arith.constant 0 : i32
    return %c0_i32, %c0_i32_0 : i32, i32
  }
  func.func @transform_4(%arg0: i32) -> (i32, i32) {
    %c0_i32 = arith.constant 0 : i32
    %c0_i32_0 = arith.constant 0 : i32
    %c0_i32_1 = arith.constant 0 : i32
    return %c0_i32, %c0_i32_0 : i32, i32
  }
  func.func @transform_5(%arg0: i32) -> (i32, i32) {
    %c0_i32 = arith.constant 0 : i32
    %c0_i32_0 = arith.constant 0 : i32
    %c0_i32_1 = arith.constant 0 : i32
    return %c0_i32, %c0_i32_0 : i32, i32
  }
  func.func @transform_6(%arg0: i32) -> (i32, i32) {
    %c0_i32 = arith.constant 0 : i32
    %c0_i32_0 = arith.constant 0 : i32
    return %c0_i32, %arg0 : i32, i32
  }
}

</mosaic_0001>

<llo_original>
// kernel: tpu_custom_call.1
$region0: #{tpu_custom_call.1}
  #allocation0 [shape = 'u32[]', space=smem, size = 0x4, offset = 0x4, fixed_abs, tag = 'smem constant byte address 0x4 - core index']
  #allocation1 [shape = 'u32[144,128]{1,0:T(1,128)}', space=vmem, size = 0x12000, scoped, tag = 'internal scratch']
  %s0 = inlined_call_operand.vmem [shape: f32[300,13], index: 0, kind: input, shape index: {}]
  %s1 = inlined_call_operand.vmem [shape: bf16[128,13], index: 1, kind: input, shape index: {}]
  %s2 = inlined_call_operand.vmem [shape: f32[128,1], index: 2, kind: input, shape index: {}]
  %s3 = inlined_call_operand.vmem [shape: bf16[64,128], index: 3, kind: input, shape index: {}]
  %s4 = inlined_call_operand.vmem [shape: f32[64,1], index: 4, kind: input, shape index: {}]
  %s5 = inlined_call_operand.vmem [shape: f32[64,1], index: 5, kind: input, shape index: {}]
  %s6 = inlined_call_operand.hbm [shape: f32[1,300], index: 6, kind: output, shape index: {}]
  %s7 = sld [smem:[#allocation0]]
  $region57: #{tpu_custom_call.1} parent=0
    _
  %s9 = ssub.s32 1, %s7
  %s10 = scalar_select 0, %s9, %s7
  $region1: #{tpu_custom_call.1} parent=0
    #allocation2 [shape = 'u8[2048]{0}', space=vmem, size = 0x800, scoped, tag = 'output window, operand 0']
    #allocation3 [shape = 's32[2]{0}', space=sflag, size = 0x8, scoped, tag = 'scoped memory for tpu_custom_call.1']
    %11 = vsyncpa [#allocation3], 0
    %s12 = scalar_lea.sflag [#allocation3], 1
    %13 = vsyncpa %s12, 0
    loop: start=0, step=1, limit=4
    $region2: #{tpu_custom_call.1} parent=1 // loop_pre_header
      _
    $region3: #{tpu_custom_call.1} parent=1 // loop_header
      %s15 = sphi 0, %s19
      %p16 = scmp.ge.s32.totalorder %s15, 4
      %s25 = sphi 0, %s27
      %s28 = sphi 0, %s25
      %s29 = sphi 0, %s28
      %s45 = sphi 0, %s29
      %s49 = sphi 0, %s49
      %s51 = sphi 0, %s49
      %s52 = sphi 0, %s51
      %s66 = sphi 0, %s52
      %s70 = sphi 0, %s70
      %s72 = sphi 0, %s70
      %s73 = sphi 0, %s72
      %s87 = sphi 0, %s73
      %s91 = sphi 0, %s91
      %s93 = sphi 0, %s91
      %s94 = sphi 0, %s93
      %s108 = sphi 0, %s94
      %s112 = sphi 0, %s112
      %s114 = sphi 0, %s112
      %s115 = sphi 0, %s114
      %s129 = sphi 0, %s115
      %s133 = sphi 0, %s133
      %s135 = sphi 0, %s133
      %s136 = sphi 0, %s135
      %s150 = sphi 0, %s136
      %s156 = sphi 0, %s158
      %s159 = sphi 0, %s156
      %s160 = sphi 0, %s159
      %s176 = sphi 0, %s160
    $region4: #{tpu_custom_call.1} parent=1 // loop_header_branch
      %18 = sbr.rel (%p16) target = $region8
    $region5: #{tpu_custom_call.1} parent=1 // loop_body
      %s20 = ssub.s32 %s15, 1
      %s21 = ssub.s32 %s15, 2
      %s22 = sadd.s32 %s15, 1
      %s23 = ssub.s32 %s15, %s22
      %p24 = scmp.eq.s32.totalorder %s23, 0
      %s26 = sadd.s32 %s25, 1
      %s27 = scalar_select %p24, %s25, %s26
      %p30 = pneg %p24
      %p31 = scmp.eq.s32.totalorder %s15, 1
      %p32 = por %p30, %p31
      %p33 = scmp.ne.s32.totalorder %s25, %s28
      %p34 = scmp.eq.s32.totalorder %s15, 0
      %p35 = por %p33, %p34
      %p36 = scmp.ne.s32.totalorder %s25, %s28
      %p37 = scmp.eq.s32.totalorder %s20, 1
      %p38 = por %p36, %p37
      %p39 = scmp.ne.s32.totalorder %s28, %s29
      %p40 = scmp.eq.s32.totalorder %s20, 0
      %p41 = por %p39, %p40
      %p42 = scmp.ne.s32.totalorder %s28, %s29
      %p43 = scmp.eq.s32.totalorder %s21, 1
      %p44 = por %p42, %p43
      %p46 = scmp.ne.s32.totalorder %s29, %s45
      %p47 = scmp.eq.s32.totalorder %s21, 0
      %p48 = por %p46, %p47
      %s50 = sadd.s32 %s49, 1
      %p53 = scmp.eq.s32.totalorder %s15, 1
      %p54 = scmp.ne.s32.totalorder %s49, %s51
      %p55 = scmp.eq.s32.totalorder %s15, 0
      %p56 = por %p54, %p55
      %p57 = scmp.ne.s32.totalorder %s49, %s51
      %p58 = scmp.eq.s32.totalorder %s20, 1
      %p59 = por %p57, %p58
      %p60 = scmp.ne.s32.totalorder %s51, %s52
      %p61 = scmp.eq.s32.totalorder %s20, 0
      %p62 = por %p60, %p61
      %p63 = scmp.ne.s32.totalorder %s51, %s52
      %p64 = scmp.eq.s32.totalorder %s21, 1
      %p65 = por %p63, %p64
      %p67 = scmp.ne.s32.totalorder %s52, %s66
      %p68 = scmp.eq.s32.totalorder %s21, 0
      %p69 = por %p67, %p68
      %s71 = sadd.s32 %s70, 1
      %p74 = scmp.eq.s32.totalorder %s15, 1
      %p75 = scmp.ne.s32.totalorder %s70, %s72
      %p76 = scmp.eq.s32.totalorder %s15, 0
      %p77 = por %p75, %p76
      %p78 = scmp.ne.s32.totalorder %s70, %s72
      %p79 = scmp.eq.s32.totalorder %s20, 1
      %p80 = por %p78, %p79
      %p81 = scmp.ne.s32.totalorder %s72, %s73
      %p82 = scmp.eq.s32.totalorder %s20, 0
      %p83 = por %p81, %p82
      %p84 = scmp.ne.s32.totalorder %s72, %s73
      %p85 = scmp.eq.s32.totalorder %s21, 1
      %p86 = por %p84, %p85
      %p88 = scmp.ne.s32.totalorder %s73, %s87
      %p89 = scmp.eq.s32.totalorder %s21, 0
      %p90 = por %p88, %p89
      %s92 = sadd.s32 %s91, 1
      %p95 = scmp.eq.s32.totalorder %s15, 1
      %p96 = scmp.ne.s32.totalorder %s91, %s93
      %p97 = scmp.eq.s32.totalorder %s15, 0
      %p98 = por %p96, %p97
      %p99 = scmp.ne.s32.totalorder %s91, %s93
      %p100 = scmp.eq.s32.totalorder %s20, 1
      %p101 = por %p99, %p100
      %p102 = scmp.ne.s32.totalorder %s93, %s94
      %p103 = scmp.eq.s32.totalorder %s20, 0
      %p104 = por %p102, %p103
      %p105 = scmp.ne.s32.totalorder %s93, %s94
      %p106 = scmp.eq.s32.totalorder %s21, 1
      %p107 = por %p105, %p106
      %p109 = scmp.ne.s32.totalorder %s94, %s108
      %p110 = scmp.eq.s32.totalorder %s21, 0
      %p111 = por %p109, %p110
      %s113 = sadd.s32 %s112, 1
      %p116 = scmp.eq.s32.totalorder %s15, 1
      %p117 = scmp.ne.s32.totalorder %s112, %s114
      %p118 = scmp.eq.s32.totalorder %s15, 0
      %p119 = por %p117, %p118
      %p120 = scmp.ne.s32.totalorder %s112, %s114
      %p121 = scmp.eq.s32.totalorder %s20, 1
      %p122 = por %p120, %p121
      %p123 = scmp.ne.s32.totalorder %s114, %s115
      %p124 = scmp.eq.s32.totalorder %s20, 0
      %p125 = por %p123, %p124
      %p126 = scmp.ne.s32.totalorder %s114, %s115
      %p127 = scmp.eq.s32.totalorder %s21, 1
      %p128 = por %p126, %p127
      %p130 = scmp.ne.s32.totalorder %s115, %s129
      %p131 = scmp.eq.s32.totalorder %s21, 0
      %p132 = por %p130, %p131
      %s134 = sadd.s32 %s133, 1
      %p137 = scmp.eq.s32.totalorder %s15, 1
      %p138 = scmp.ne.s32.totalorder %s133, %s135
      %p139 = scmp.eq.s32.totalorder %s15, 0
      %p140 = por %p138, %p139
      %p141 = scmp.ne.s32.totalorder %s133, %s135
      %p142 = scmp.eq.s32.totalorder %s20, 1
      %p143 = por %p141, %p142
      %p144 = scmp.ne.s32.totalorder %s135, %s136
      %p145 = scmp.eq.s32.totalorder %s20, 0
      %p146 = por %p144, %p145
      %p147 = scmp.ne.s32.totalorder %s135, %s136
      %p148 = scmp.eq.s32.totalorder %s21, 1
      %p149 = por %p147, %p148
      %p151 = scmp.ne.s32.totalorder %s136, %s150
      %p152 = scmp.eq.s32.totalorder %s21, 0
      %p153 = por %p151, %p152
      %s154 = ssub.s32 %s15, %s22
      %p155 = scmp.eq.s32.totalorder %s154, 0
      %s157 = sadd.s32 %s156, 1
      %s158 = scalar_select %p155, %s156, %s157
      %p161 = pneg %p155
      %p162 = scmp.eq.s32.totalorder %s15, 1
      %p163 = por %p161, %p162
      %p164 = scmp.ne.s32.totalorder %s156, %s159
      %p165 = scmp.eq.s32.totalorder %s15, 0
      %p166 = por %p164, %p165
      %p167 = scmp.ne.s32.totalorder %s156, %s159
      %p168 = scmp.eq.s32.totalorder %s20, 1
      %p169 = por %p167, %p168
      %p170 = scmp.ne.s32.totalorder %s159, %s160
      %p171 = scmp.eq.s32.totalorder %s20, 0
      %p172 = por %p170, %p171
      %p173 = scmp.ne.s32.totalorder %s159, %s160
      %p174 = scmp.eq.s32.totalorder %s21, 1
      %p175 = por %p173, %p174
      %p177 = scmp.ne.s32.totalorder %s160, %s176
      %p178 = scmp.eq.s32.totalorder %s21, 0
      %p179 = por %p177, %p178
      %p180 = scmp.le.s32.totalorder 1, %s15
      %p181 = scmp.lt.s32.totalorder %s15, 3
      %p182 = pnand %p180, %p181
      %p183 = pneg %p182
      // Predicated region
      $region9: #{tpu_custom_call.1} parent=5 // pred_check
        _
      $region10: #{tpu_custom_call.1} parent=5 // pred_check_branch
        %185 = sbr.rel (%p182) target = $region12
      $region11: #{tpu_custom_call.1} parent=5 // pred_region
        %s186 = ssub.s32 %s15, 1
        // Predicated region
        $region13: #{tpu_custom_call.1} parent=11 // pred_check
          %p187 = pneg %p62
        $region14: #{tpu_custom_call.1} parent=11 // pred_check_branch
          %189 = sbr.rel (%p187) target = $region16
        $region15: #{tpu_custom_call.1} parent=11 // pred_region
          _
        $region16: #{tpu_custom_call.1} parent=11 // pred_fallthru
          _
        // Predicated region
        $region17: #{tpu_custom_call.1} parent=11 // pred_check
          %p190 = pneg %p83
        $region18: #{tpu_custom_call.1} parent=11 // pred_check_branch
          %192 = sbr.rel (%p190) target = $region20
        $region19: #{tpu_custom_call.1} parent=11 // pred_region
          _
        $region20: #{tpu_custom_call.1} parent=11 // pred_fallthru
          _
        // Predicated region
        $region21: #{tpu_custom_call.1} parent=11 // pred_check
          %p193 = pneg %p104
        $region22: #{tpu_custom_call.1} parent=11 // pred_check_branch
          %195 = sbr.rel (%p193) target = $region24
        $region23: #{tpu_custom_call.1} parent=11 // pred_region
          _
        $region24: #{tpu_custom_call.1} parent=11 // pred_fallthru
          _
        // Predicated region
        $region25: #{tpu_custom_call.1} parent=11 // pred_check
          %p196 = pneg %p125
        $region26: #{tpu_custom_call.1} parent=11 // pred_check_branch
          %198 = sbr.rel (%p196) target = $region28
        $region27: #{tpu_custom_call.1} parent=11 // pred_region
          _
        $region28: #{tpu_custom_call.1} parent=11 // pred_fallthru
          _
        // Predicated region
        $region29: #{tpu_custom_call.1} parent=11 // pred_check
          %p199 = pneg %p146
        $region30: #{tpu_custom_call.1} parent=11 // pred_check_branch
          %201 = sbr.rel (%p199) target = $region32
        $region31: #{tpu_custom_call.1} parent=11 // pred_region
          _
        $region32: #{tpu_custom_call.1} parent=11 // pred_fallthru
          _
      $region12: #{tpu_custom_call.1} parent=5 // pred_fallthru
        _
      %p202 = scmp.lt.s32.totalorder %s15, 2
      // Predicated region
      $region33: #{tpu_custom_call.1} parent=5 // pred_check
        %p203 = pneg %p202
      $region34: #{tpu_custom_call.1} parent=5 // pred_check_branch
        %205 = sbr.rel (%p203) target = $region36
      $region35: #{tpu_custom_call.1} parent=5 // pred_region
        // Predicated region
        $region37: #{tpu_custom_call.1} parent=35 // pred_check
          %p206 = pneg %p35
        $region38: #{tpu_custom_call.1} parent=35 // pred_check_branch
          %208 = sbr.rel (%p206) target = $region40
        $region39: #{tpu_custom_call.1} parent=35 // pred_region
          %s209 = smul.u32 32, %s15
          %s210 = ssub.s32 38, %s209
          %p211 = scmp.lt.s32.totalorder %s210, 32
          %s212 = scalar_select %p211, %s210, 32
          %s213 = smul.u32 128, %s212
          %p214 = scmp.lt.s32.totalorder %s209, 37
          %s215 = scalar_select %p214, %s209, 37
          %s216 = smul.addr %s215, 8
          %s217 = scalar_lea.vmem %s0, %s216
          %s218 = smul.u32 32, %s15
          %s219 = ssub.s32 38, %s218
          %p220 = scmp.lt.s32.totalorder %s219, 32
          %s221 = scalar_select %p220, %s219, 32
          %s222 = smul.u32 128, %s221
        $region40: #{tpu_custom_call.1} parent=35 // pred_fallthru
          _
      $region36: #{tpu_custom_call.1} parent=5 // pred_fallthru
        _
      %p223 = scmp.le.s32.totalorder 1, %s15
      %p224 = scmp.lt.s32.totalorder %s15, 3
      %p225 = pnand %p223, %p224
      %p226 = pneg %p225
      // Predicated region
      $region41: #{tpu_custom_call.1} parent=5 // pred_check
        _
      $region42: #{tpu_custom_call.1} parent=5 // pred_check_branch
        %228 = sbr.rel (%p225) target = $region44
      $region43: #{tpu_custom_call.1} parent=5 // pred_region
        %s229 = ssub.s32 %s15, 1
        %s230 = smul.u32 32, %s20
        %s231 = ssub.s32 38, %s230
        %p232 = scmp.lt.s32.totalorder %s231, 32
        %s233 = scalar_select %p232, %s231, 32
        %s234 = smul.u32 128, %s233
        %p235 = scmp.lt.s32.totalorder %s230, 37
        %s236 = scalar_select %p235, %s230, 37
        %s237 = smul.addr %s236, 8
        %s238 = scalar_lea.vmem %s0, %s237
        %p239 = pneg %p41
        %p240 = pneg %p38
        %p241 = pneg %p62
        %p242 = pneg %p59
        %p243 = pneg %p83
        %p244 = pneg %p80
        %p245 = pneg %p104
        %p246 = pneg %p101
        %p247 = pneg %p125
        %p248 = pneg %p122
        %p249 = pneg %p146
        %p250 = pneg %p143
        %p251 = pneg %p172
        %p252 = pneg %p169
        %s253 = sand.u32 %s159, 1
        %s254 = scalar_lea.sflag [#allocation3], %s253
        %s255 = sand.u32 %s159, 1
        %s256 = smul.addr %s255, 2
        %s257 = scalar_lea.vmem [#allocation2], %s256
        %s258 = smul.u32 32, %s20
        %s259 = ssub.s32 38, %s258
        %p260 = scmp.lt.s32.totalorder %s259, 32
        %s261 = scalar_select %p260, %s259, 32
        %s262 = smul.u32 128, %s261
        %p263 = scmp.lt.s32.totalorder %s258, 37
        %s264 = scalar_select %p263, %s258, 37
        %s265 = smul.addr %s264, 8
        %s266 = scalar_lea.vmem %s0, %s265
        %s267 = smul.u32 32, %s20
        %s268 = ssub.s32 38, %s267
        %p269 = scmp.lt.s32.totalorder %s268, 32
        %s270 = scalar_select %p269, %s268, 32
        %s271 = smul.u32 128, %s270
        %s272 = smul.u32 2, %s20
        %s273 = ssub.s32 3, %s272
        %p274 = scmp.lt.s32.totalorder %s273, 2
        %s275 = scalar_select %p274, %s273, 2
        %s276 = smul.u32 16, %s275
        %v278 = vld [vmem:[%s266] sm:$0xff]
        %v279 = vld [vmem:[%s266 + $0x8] sm:$0xff]
        %v280 = vld [vmem:[%s266 + $0x10] sm:$0xff]
        %v281 = vld [vmem:[%s266 + $0x18] sm:$0xff]
        %v282 = vld [vmem:[%s266 + $0x20] sm:$0xff]
        %v283 = vld [vmem:[%s266 + $0x28] sm:$0xff]
        %v284 = vld [vmem:[%s266 + $0x30] sm:$0xff]
        %v285 = vld [vmem:[%s266 + $0x38] sm:$0xff]
        %v286 = vld [vmem:[%s266 + $0x40] sm:$0xff]
        %v287 = vld [vmem:[%s266 + $0x48] sm:$0xff]
        %v288 = vld [vmem:[%s266 + $0x50] sm:$0xff]
        %v289 = vld [vmem:[%s266 + $0x58] sm:$0xff]
        %v290 = vld [vmem:[%s266 + $0x60] sm:$0xff]
        %v291 = vld [vmem:[%s266 + $0x68] sm:$0xff]
        %v292 = vld [vmem:[%s266 + $0x70] sm:$0xff]
        %v293 = vld [vmem:[%s266 + $0x78] sm:$0xff]
        %v294 = vld [vmem:[%s266 + $0x80] sm:$0xff]
        %v295 = vld [vmem:[%s266 + $0x88] sm:$0xff]
        %v296 = vld [vmem:[%s266 + $0x90] sm:$0xff]
        %v297 = vld [vmem:[%s266 + $0x98] sm:$0xff]
        %v298 = vld [vmem:[%s266 + $0xa0] sm:$0xff]
        %v299 = vld [vmem:[%s266 + $0xa8] sm:$0xff]
        %v300 = vld [vmem:[%s266 + $0xb0] sm:$0xff]
        %v301 = vld [vmem:[%s266 + $0xb8] sm:$0xff]
        %v302 = vld [vmem:[%s266 + $0xc0] sm:$0xff]
        %v303 = vld [vmem:[%s266 + $0xc8] sm:$0xff]
        %v304 = vld [vmem:[%s266 + $0xd0] sm:$0xff]
        %v305 = vld [vmem:[%s266 + $0xd8] sm:$0xff]
        %v306 = vld [vmem:[%s266 + $0xe0] sm:$0xff]
        %v307 = vld [vmem:[%s266 + $0xe8] sm:$0xff]
        %v308 = vld [vmem:[%s266 + $0xf0] sm:$0xff]
        %v309 = vld [vmem:[%s266 + $0xf8] sm:$0xff]
        %310 = vxpose.xlu0.b32.start [1/16] %v278, 128
        %311 = vxpose.xlu0.b32.cont [2/16] %v279, 128
        %312 = vxpose.xlu0.b32.cont [3/16] %v280, 128
        %313 = vxpose.xlu0.b32.cont [4/16] %v281, 128
        %314 = vxpose.xlu0.b32.cont [5/16] %v282, 128
        %315 = vxpose.xlu0.b32.cont [6/16] %v283, 128
        %316 = vxpose.xlu0.b32.cont [7/16] %v284, 128
        %317 = vxpose.xlu0.b32.cont [8/16] %v285, 128
        %318 = vxpose.xlu0.b32.cont [9/16] %v286, 128
        %319 = vxpose.xlu0.b32.cont [10/16] %v287, 128
        %320 = vxpose.xlu0.b32.cont [11/16] %v288, 128
        %321 = vxpose.xlu0.b32.cont [12/16] %v289, 128
        %322 = vxpose.xlu0.b32.cont [13/16] %v290, 128
        %323 = vxpose.xlu0.b32.cont [14/16] %v291, 128
        %324 = vxpose.xlu0.b32.cont [15/16] %v292, 128
        %325 = vxpose.xlu0.b32.end [16/16] %v293, 128
        %v326 = vpop.trf.xlu0
        %v327 = vpop.trf.xlu0
        %v328 = vpop.trf.xlu0
        %v329 = vpop.trf.xlu0
        %v330 = vpop.trf.xlu0
        %v331 = vpop.trf.xlu0
        %v332 = vpop.trf.xlu0
        %v333 = vpop.trf.xlu0
        %v334 = vpop.trf.xlu0
        %v335 = vpop.trf.xlu0
        %v336 = vpop.trf.xlu0
        %v337 = vpop.trf.xlu0
        %v338 = vpop.trf.xlu0
        %v339 = vpop.trf.xlu0
        %v340 = vpop.trf.xlu0
        %v341 = vpop.trf.xlu0
        %342 = vxpose.xlu0.b32.start [1/16] %v294, 128
        %343 = vxpose.xlu0.b32.cont [2/16] %v295, 128
        %344 = vxpose.xlu0.b32.cont [3/16] %v296, 128
        %345 = vxpose.xlu0.b32.cont [4/16] %v297, 128
        %346 = vxpose.xlu0.b32.cont [5/16] %v298, 128
        %347 = vxpose.xlu0.b32.cont [6/16] %v299, 128
        %348 = vxpose.xlu0.b32.cont [7/16] %v300, 128
        %349 = vxpose.xlu0.b32.cont [8/16] %v301, 128
        %350 = vxpose.xlu0.b32.cont [9/16] %v302, 128
        %351 = vxpose.xlu0.b32.cont [10/16] %v303, 128
        %352 = vxpose.xlu0.b32.cont [11/16] %v304, 128
        %353 = vxpose.xlu0.b32.cont [12/16] %v305, 128
        %354 = vxpose.xlu0.b32.cont [13/16] %v306, 128
        %355 = vxpose.xlu0.b32.cont [14/16] %v307, 128
        %356 = vxpose.xlu0.b32.cont [15/16] %v308, 128
        %357 = vxpose.xlu0.b32.end [16/16] %v309, 128
        %v358 = vpop.trf.xlu0
        %v359 = vpop.trf.xlu0
        %v360 = vpop.trf.xlu0
        %v361 = vpop.trf.xlu0
        %v362 = vpop.trf.xlu0
        %v363 = vpop.trf.xlu0
        %v364 = vpop.trf.xlu0
        %v365 = vpop.trf.xlu0
        %v366 = vpop.trf.xlu0
        %v367 = vpop.trf.xlu0
        %v368 = vpop.trf.xlu0
        %v369 = vpop.trf.xlu0
        %v370 = vpop.trf.xlu0
        %v371 = vpop.trf.xlu0
        %v372 = vpop.trf.xlu0
        %v373 = vpop.trf.xlu0
        %v374 = vpack.c.bf16 %v327, %v326
        %v375 = vpack.c.bf16 %v359, %v358
        %v376 = vld [vmem:[%s1] sm:$0xf]
        %v377 = vld [vmem:[%s1 + $0x4] sm:$0xf]
        %v378 = vld [vmem:[%s1 + $0x8] sm:$0xf]
        %v379 = vld [vmem:[%s1 + $0xc] sm:$0xf]
        %v380 = vld [vmem:[%s1 + $0x10] sm:$0xf]
        %v381 = vld [vmem:[%s1 + $0x14] sm:$0xf]
        %v382 = vld [vmem:[%s1 + $0x18] sm:$0xf]
        %v383 = vld [vmem:[%s1 + $0x1c] sm:$0xf]
        %v384 = vld [vmem:[%s1 + $0x20] sm:$0xf]
        %v385 = vld [vmem:[%s1 + $0x24] sm:$0xf]
        %v386 = vld [vmem:[%s1 + $0x28] sm:$0xf]
        %v387 = vld [vmem:[%s1 + $0x2c] sm:$0xf]
        %v388 = vld [vmem:[%s1 + $0x30] sm:$0xf]
        %v389 = vld [vmem:[%s1 + $0x34] sm:$0xf]
        %v390 = vld [vmem:[%s1 + $0x38] sm:$0xf]
        %v391 = vld [vmem:[%s1 + $0x3c] sm:$0xf]
        %v392 = vld [vmem:[%s2] sm:$0xff]
        %v393 = vld [vmem:[%s2 + $0x8] sm:$0xff]
        %v394 = vld [vmem:[%s2 + $0x10] sm:$0xff]
        %v395 = vld [vmem:[%s2 + $0x18] sm:$0xff]
        %v396 = vld [vmem:[%s2 + $0x20] sm:$0xff]
        %v397 = vld [vmem:[%s2 + $0x28] sm:$0xff]
        %v398 = vld [vmem:[%s2 + $0x30] sm:$0xff]
        %v399 = vld [vmem:[%s2 + $0x38] sm:$0xff]
        %v400 = vld [vmem:[%s2 + $0x40] sm:$0xff]
        %v401 = vld [vmem:[%s2 + $0x48] sm:$0xff]
        %v402 = vld [vmem:[%s2 + $0x50] sm:$0xff]
        %v403 = vld [vmem:[%s2 + $0x58] sm:$0xff]
        %v404 = vld [vmem:[%s2 + $0x60] sm:$0xff]
        %v405 = vld [vmem:[%s2 + $0x68] sm:$0xff]
        %v406 = vld [vmem:[%s2 + $0x70] sm:$0xff]
        %v407 = vld [vmem:[%s2 + $0x78] sm:$0xff]
        %409 = vset.pattern.permute.xlu0 0
        %410 = vperm.xlu0 %409, %v392
        %v411 = vpop.permute.xlu0 %410
        %414 = vset.pattern.permute.xlu0 0
        %415 = vperm.xlu0 %414, %v393
        %v416 = vpop.permute.xlu0 %415
        %419 = vset.pattern.permute.xlu0 0
        %420 = vperm.xlu0 %419, %v394
        %v421 = vpop.permute.xlu0 %420
        %424 = vset.pattern.permute.xlu0 0
        %425 = vperm.xlu0 %424, %v395
        %v426 = vpop.permute.xlu0 %425
        %429 = vset.pattern.permute.xlu0 0
        %430 = vperm.xlu0 %429, %v396
        %v431 = vpop.permute.xlu0 %430
        %434 = vset.pattern.permute.xlu0 0
        %435 = vperm.xlu0 %434, %v397
        %v436 = vpop.permute.xlu0 %435
        %439 = vset.pattern.permute.xlu0 0
        %440 = vperm.xlu0 %439, %v398
        %v441 = vpop.permute.xlu0 %440
        %444 = vset.pattern.permute.xlu0 0
        %445 = vperm.xlu0 %444, %v399
        %v446 = vpop.permute.xlu0 %445
        %449 = vset.pattern.permute.xlu0 0
        %450 = vperm.xlu0 %449, %v400
        %v451 = vpop.permute.xlu0 %450
        %454 = vset.pattern.permute.xlu0 0
        %455 = vperm.xlu0 %454, %v401
        %v456 = vpop.permute.xlu0 %455
        %459 = vset.pattern.permute.xlu0 0
        %460 = vperm.xlu0 %459, %v402
        %v461 = vpop.permute.xlu0 %460
        %464 = vset.pattern.permute.xlu0 0
        %465 = vperm.xlu0 %464, %v403
        %v466 = vpop.permute.xlu0 %465
        %469 = vset.pattern.permute.xlu0 0
        %470 = vperm.xlu0 %469, %v404
        %v471 = vpop.permute.xlu0 %470
        %474 = vset.pattern.permute.xlu0 0
        %475 = vperm.xlu0 %474, %v405
        %v476 = vpop.permute.xlu0 %475
        %479 = vset.pattern.permute.xlu0 0
        %480 = vperm.xlu0 %479, %v406
        %v481 = vpop.permute.xlu0 %480
        %484 = vset.pattern.permute.xlu0 0
        %485 = vperm.xlu0 %484, %v407
        %v486 = vpop.permute.xlu0 %485
        %v504 = vunpack.c.l.b16 %v376
        %v505 = vunpack.c.l.b16 %v377
        %v506 = vunpack.c.l.b16 %v378
        %v507 = vunpack.c.l.b16 %v379
        %v508 = vunpack.c.l.b16 %v380
        %v509 = vunpack.c.l.b16 %v381
        %v510 = vunpack.c.l.b16 %v382
        %v511 = vunpack.c.l.b16 %v383
        %v512 = vunpack.c.l.b16 %v384
        %v513 = vunpack.c.l.b16 %v385
        %v514 = vunpack.c.l.b16 %v386
        %v515 = vunpack.c.l.b16 %v387
        %v516 = vunpack.c.l.b16 %v388
        %v517 = vunpack.c.l.b16 %v389
        %v518 = vunpack.c.l.b16 %v390
        %v519 = vunpack.c.l.b16 %v391
        %v520 = vpack.c.b16 %v505, %v504
        %v521 = vpack.c.b16 %v507, %v506
        %v522 = vpack.c.b16 %v509, %v508
        %v523 = vpack.c.b16 %v511, %v510
        %v524 = vpack.c.b16 %v513, %v512
        %v525 = vpack.c.b16 %v515, %v514
        %v526 = vpack.c.b16 %v517, %v516
        %v527 = vpack.c.b16 %v519, %v518
        %vm528 = vcmask 105472
        %v530 = vsel %vm528, %v520, 0
        %v533 = vsel %vm528, %v521, 0
        %v536 = vsel %vm528, %v522, 0
        %v539 = vsel %vm528, %v523, 0
        %v542 = vsel %vm528, %v524, 0
        %v545 = vsel %vm528, %v525, 0
        %v548 = vsel %vm528, %v526, 0
        %v551 = vsel %vm528, %v527, 0
        %vm553 = vcmask 1045504
        %vm554 = vcmask 1046528
        %v555 = vsel %vm553, 4294967295, 65535
        %v556 = vsel %vm554, %v555, 0
        %v558 = vand.u32 %v374, %v556
        %v561 = vand.u32 %v375, %v556
        %563 = vmatprep.subr.bf16.mxu0 0
        %564 = vmatpush1.bf16.msra.mxu0 0
        %565 = vmatprep.subr.bf16.mxu0 0
        %566 = vmatpush1.bf16.msra.mxu0 0
        %567 = vmatprep.subr.bf16.mxu0 0
        %568 = vmatpush1.bf16.msra.mxu0 0
        %569 = vmatprep.subr.bf16.mxu0 0
        %570 = vmatpush1.bf16.msra.mxu0 0
        %571 = vmatprep.subr.bf16.mxu0 0
        %572 = vmatpush1.bf16.msra.mxu0 0
        %573 = vmatprep.subr.bf16.mxu0 0
        %574 = vmatpush1.bf16.msra.mxu0 0
        %575 = vmatprep.subr.bf16.mxu0 0
        %576 = vmatpush1.bf16.msra.mxu0 0
        %577 = vmatprep.subr.bf16.mxu0 %v561
        %578 = vmatpush1.bf16.msra.mxu0 %v558
        %579 = vmatprep.subr.bf16.mxu0 0
        %580 = vmatpush2.bf16.msra.mxu0 0
        %581 = vmatprep.subr.bf16.mxu0 0
        %582 = vmatpush2.bf16.msra.mxu0 0
        %583 = vmatprep.subr.bf16.mxu0 0
        %584 = vmatpush2.bf16.msra.mxu0 0
        %585 = vmatprep.subr.bf16.mxu0 0
        %586 = vmatpush2.bf16.msra.mxu0 0
        %587 = vmatprep.subr.bf16.mxu0 0
        %588 = vmatpush2.bf16.msra.mxu0 0
        %589 = vmatprep.subr.bf16.mxu0 0
        %590 = vmatpush2.bf16.msra.mxu0 0
        %591 = vmatprep.subr.bf16.mxu0 0
        %592 = vmatpush2.bf16.msra.mxu0 0
        %593 = vmatprep.subr.bf16.mxu0 0
        %594 = vmatpush2.bf16.msra.mxu0 0
        %595 = vmatprep.mubr.bf16.mxu0 0
        %596 = vmatmul.mubr.bf16.gmra.mxu0 %v530
        %v597 = vpop.f32.mrf.mxu0
        %v598 = vadd.f32 %v411, %v597
        %v599 = vpop.f32.mrf.mxu0
        %v600 = vadd.f32 %v411, %v599
        %v601 = vpop.f32.mrf.mxu0
        %v602 = vadd.f32 %v416, %v601
        %v603 = vpop.f32.mrf.mxu0
        %v604 = vadd.f32 %v416, %v603
        %605 = vmatprep.mubr.bf16.mxu0 0
        %606 = vmatmul.mubr.bf16.gmra.mxu0 %v533
        %v607 = vpop.f32.mrf.mxu0
        %v608 = vadd.f32 %v421, %v607
        %v609 = vpop.f32.mrf.mxu0
        %v610 = vadd.f32 %v421, %v609
        %v611 = vpop.f32.mrf.mxu0
        %v612 = vadd.f32 %v426, %v611
        %v613 = vpop.f32.mrf.mxu0
        %v614 = vadd.f32 %v426, %v613
        %615 = vmatprep.mubr.bf16.mxu0 0
        %616 = vmatmul.mubr.bf16.gmra.mxu0 %v536
        %v617 = vpop.f32.mrf.mxu0
        %v618 = vadd.f32 %v431, %v617
        %v619 = vpop.f32.mrf.mxu0
        %v620 = vadd.f32 %v431, %v619
        %v621 = vpop.f32.mrf.mxu0
        %v622 = vadd.f32 %v436, %v621
        %v623 = vpop.f32.mrf.mxu0
        %v624 = vadd.f32 %v436, %v623
        %625 = vmatprep.mubr.bf16.mxu0 0
        %626 = vmatmul.mubr.bf16.gmra.mxu0 %v539
        %v627 = vpop.f32.mrf.mxu0
        %v628 = vadd.f32 %v441, %v627
        %v629 = vpop.f32.mrf.mxu0
        %v630 = vadd.f32 %v441, %v629
        %v631 = vpop.f32.mrf.mxu0
        %v632 = vadd.f32 %v446, %v631
        %v633 = vpop.f32.mrf.mxu0
        %v634 = vadd.f32 %v446, %v633
        %635 = vmatprep.mubr.bf16.mxu0 0
        %636 = vmatmul.mubr.bf16.gmra.mxu0 %v542
        %v637 = vpop.f32.mrf.mxu0
        %v638 = vadd.f32 %v451, %v637
        %v639 = vpop.f32.mrf.mxu0
        %v640 = vadd.f32 %v451, %v639
        %v641 = vpop.f32.mrf.mxu0
        %v642 = vadd.f32 %v456, %v641
        %v643 = vpop.f32.mrf.mxu0
        %v644 = vadd.f32 %v456, %v643
        %645 = vmatprep.mubr.bf16.mxu0 0
        %646 = vmatmul.mubr.bf16.gmra.mxu0 %v545
        %v647 = vpop.f32.mrf.mxu0
        %v648 = vadd.f32 %v461, %v647
        %v649 = vpop.f32.mrf.mxu0
        %v650 = vadd.f32 %v461, %v649
        %v651 = vpop.f32.mrf.mxu0
        %v652 = vadd.f32 %v466, %v651
        %v653 = vpop.f32.mrf.mxu0
        %v654 = vadd.f32 %v466, %v653
        %655 = vmatprep.mubr.bf16.mxu0 0
        %656 = vmatmul.mubr.bf16.gmra.mxu0 %v548
        %v657 = vpop.f32.mrf.mxu0
        %v658 = vadd.f32 %v471, %v657
        %v659 = vpop.f32.mrf.mxu0
        %v660 = vadd.f32 %v471, %v659
        %v661 = vpop.f32.mrf.mxu0
        %v662 = vadd.f32 %v476, %v661
        %v663 = vpop.f32.mrf.mxu0
        %v664 = vadd.f32 %v476, %v663
        %665 = vmatprep.mubr.bf16.mxu0 0
        %666 = vmatmul.mubr.bf16.gmra.mxu0 %v551
        %v667 = vpop.f32.mrf.mxu0
        %v668 = vadd.f32 %v481, %v667
        %v669 = vpop.f32.mrf.mxu0
        %v670 = vadd.f32 %v481, %v669
        %v671 = vpop.f32.mrf.mxu0
        %v672 = vadd.f32 %v486, %v671
        %v673 = vpop.f32.mrf.mxu0
        %v674 = vadd.f32 %v486, %v673
        %675 = vdwg.mxu0
        %v676 = vmul.f32 %v598, 0.01
        %v677 = vmul.f32 %v600, 0.01
        %v678 = vmul.f32 %v602, 0.01
        %v679 = vmul.f32 %v604, 0.01
        %v680 = vmul.f32 %v608, 0.01
        %v681 = vmul.f32 %v610, 0.01
        %v682 = vmul.f32 %v612, 0.01
        %v683 = vmul.f32 %v614, 0.01
        %v684 = vmul.f32 %v618, 0.01
        %v685 = vmul.f32 %v620, 0.01
        %v686 = vmul.f32 %v622, 0.01
        %v687 = vmul.f32 %v624, 0.01
        %v688 = vmul.f32 %v628, 0.01
        %v689 = vmul.f32 %v630, 0.01
        %v690 = vmul.f32 %v632, 0.01
        %v691 = vmul.f32 %v634, 0.01
        %v692 = vmul.f32 %v638, 0.01
        %v693 = vmul.f32 %v640, 0.01
        %v694 = vmul.f32 %v642, 0.01
        %v695 = vmul.f32 %v644, 0.01
        %v696 = vmul.f32 %v648, 0.01
        %v697 = vmul.f32 %v650, 0.01
        %v698 = vmul.f32 %v652, 0.01
        %v699 = vmul.f32 %v654, 0.01
        %v700 = vmul.f32 %v658, 0.01
        %v701 = vmul.f32 %v660, 0.01
        %v702 = vmul.f32 %v662, 0.01
        %v703 = vmul.f32 %v664, 0.01
        %v704 = vmul.f32 %v668, 0.01
        %v705 = vmul.f32 %v670, 0.01
        %v706 = vmul.f32 %v672, 0.01
        %v707 = vmul.f32 %v674, 0.01
        %v708 = vmax.f32 %v598, %v676
        %v709 = vmax.f32 %v600, %v677
        %v710 = vmax.f32 %v602, %v678
        %v711 = vmax.f32 %v604, %v679
        %v712 = vmax.f32 %v608, %v680
        %v713 = vmax.f32 %v610, %v681
        %v714 = vmax.f32 %v612, %v682
        %v715 = vmax.f32 %v614, %v683
        %v716 = vmax.f32 %v618, %v684
        %v717 = vmax.f32 %v620, %v685
        %v718 = vmax.f32 %v622, %v686
        %v719 = vmax.f32 %v624, %v687
        %v720 = vmax.f32 %v628, %v688
        %v721 = vmax.f32 %v630, %v689
        %v722 = vmax.f32 %v632, %v690
        %v723 = vmax.f32 %v634, %v691
        %v724 = vmax.f32 %v638, %v692
        %v725 = vmax.f32 %v640, %v693
        %v726 = vmax.f32 %v642, %v694
        %v727 = vmax.f32 %v644, %v695
        %v728 = vmax.f32 %v648, %v696
        %v729 = vmax.f32 %v650, %v697
        %v730 = vmax.f32 %v652, %v698
        %v731 = vmax.f32 %v654, %v699
        %v732 = vmax.f32 %v658, %v700
        %v733 = vmax.f32 %v660, %v701
        %v734 = vmax.f32 %v662, %v702
        %v735 = vmax.f32 %v664, %v703
        %v736 = vmax.f32 %v668, %v704
        %v737 = vmax.f32 %v670, %v705
        %v738 = vmax.f32 %v672, %v706
        %v739 = vmax.f32 %v674, %v707
        %v740 = vld [vmem:[%s3] sm:$0xf]
        %v741 = vld [vmem:[%s3 + $0x4] sm:$0xf]
        %v742 = vld [vmem:[%s3 + $0x8] sm:$0xf]
        %v743 = vld [vmem:[%s3 + $0xc] sm:$0xf]
        %v744 = vld [vmem:[%s3 + $0x10] sm:$0xf]
        %v745 = vld [vmem:[%s3 + $0x14] sm:$0xf]
        %v746 = vld [vmem:[%s3 + $0x18] sm:$0xf]
        %v747 = vld [vmem:[%s3 + $0x1c] sm:$0xf]
        %v748 = vpack.c.bf16 %v710, %v708
        %v749 = vpack.c.bf16 %v711, %v709
        %v750 = vpack.c.bf16 %v714, %v712
        %v751 = vpack.c.bf16 %v715, %v713
        %v752 = vpack.c.bf16 %v718, %v716
        %v753 = vpack.c.bf16 %v719, %v717
        %v754 = vpack.c.bf16 %v722, %v720
        %v755 = vpack.c.bf16 %v723, %v721
        %v756 = vpack.c.bf16 %v726, %v724
        %v757 = vpack.c.bf16 %v727, %v725
        %v758 = vpack.c.bf16 %v730, %v728
        %v759 = vpack.c.bf16 %v731, %v729
        %v760 = vpack.c.bf16 %v734, %v732
        %v761 = vpack.c.bf16 %v735, %v733
        %v762 = vpack.c.bf16 %v738, %v736
        %v763 = vpack.c.bf16 %v739, %v737
        %v764 = vld [vmem:[%s4] sm:$0xff]
        %v765 = vld [vmem:[%s4 + $0x8] sm:$0xff]
        %v766 = vld [vmem:[%s4 + $0x10] sm:$0xff]
        %v767 = vld [vmem:[%s4 + $0x18] sm:$0xff]
        %v768 = vld [vmem:[%s4 + $0x20] sm:$0xff]
        %v769 = vld [vmem:[%s4 + $0x28] sm:$0xff]
        %v770 = vld [vmem:[%s4 + $0x30] sm:$0xff]
        %v771 = vld [vmem:[%s4 + $0x38] sm:$0xff]
        %773 = vset.pattern.permute.xlu0 0
        %774 = vperm.xlu0 %773, %v764
        %v775 = vpop.permute.xlu0 %774
        %778 = vset.pattern.permute.xlu0 0
        %779 = vperm.xlu0 %778, %v765
        %v780 = vpop.permute.xlu0 %779
        %783 = vset.pattern.permute.xlu0 0
        %784 = vperm.xlu0 %783, %v766
        %v785 = vpop.permute.xlu0 %784
        %788 = vset.pattern.permute.xlu0 0
        %789 = vperm.xlu0 %788, %v767
        %v790 = vpop.permute.xlu0 %789
        %793 = vset.pattern.permute.xlu0 0
        %794 = vperm.xlu0 %793, %v768
        %v795 = vpop.permute.xlu0 %794
        %798 = vset.pattern.permute.xlu0 0
        %799 = vperm.xlu0 %798, %v769
        %v800 = vpop.permute.xlu0 %799
        %803 = vset.pattern.permute.xlu0 0
        %804 = vperm.xlu0 %803, %v770
        %v805 = vpop.permute.xlu0 %804
        %808 = vset.pattern.permute.xlu0 0
        %809 = vperm.xlu0 %808, %v771
        %v810 = vpop.permute.xlu0 %809
        %v820 = vunpack.c.l.b16 %v740
        %v821 = vunpack.c.l.b16 %v741
        %v822 = vunpack.c.l.b16 %v742
        %v823 = vunpack.c.l.b16 %v743
        %v824 = vunpack.c.l.b16 %v744
        %v825 = vunpack.c.l.b16 %v745
        %v826 = vunpack.c.l.b16 %v746
        %v827 = vunpack.c.l.b16 %v747
        %v828 = vpack.c.b16 %v821, %v820
        %v829 = vpack.c.b16 %v823, %v822
        %v830 = vpack.c.b16 %v825, %v824
        %v831 = vpack.c.b16 %v827, %v826
        %836 = vmatprep.subr.bf16.mxu0 %v763
        %837 = vmatpush1.bf16.msra.mxu0 %v762
        %838 = vmatprep.subr.bf16.mxu0 %v761
        %839 = vmatpush1.bf16.msra.mxu0 %v760
        %840 = vmatprep.subr.bf16.mxu0 %v759
        %841 = vmatpush1.bf16.msra.mxu0 %v758
        %842 = vmatprep.subr.bf16.mxu0 %v757
        %843 = vmatpush1.bf16.msra.mxu0 %v756
        %844 = vmatprep.subr.bf16.mxu0 %v755
        %845 = vmatpush1.bf16.msra.mxu0 %v754
        %846 = vmatprep.subr.bf16.mxu0 %v753
        %847 = vmatpush1.bf16.msra.mxu0 %v752
        %848 = vmatprep.subr.bf16.mxu0 %v751
        %849 = vmatpush1.bf16.msra.mxu0 %v750
        %850 = vmatprep.subr.bf16.mxu0 %v749
        %851 = vmatpush1.bf16.msra.mxu0 %v748
        %852 = vmatprep.subr.bf16.mxu0 0
        %853 = vmatpush2.bf16.msra.mxu0 0
        %854 = vmatprep.subr.bf16.mxu0 0
        %855 = vmatpush2.bf16.msra.mxu0 0
        %856 = vmatprep.subr.bf16.mxu0 0
        %857 = vmatpush2.bf16.msra.mxu0 0
        %858 = vmatprep.subr.bf16.mxu0 0
        %859 = vmatpush2.bf16.msra.mxu0 0
        %860 = vmatprep.subr.bf16.mxu0 0
        %861 = vmatpush2.bf16.msra.mxu0 0
        %862 = vmatprep.subr.bf16.mxu0 0
        %863 = vmatpush2.bf16.msra.mxu0 0
        %864 = vmatprep.subr.bf16.mxu0 0
        %865 = vmatpush2.bf16.msra.mxu0 0
        %866 = vmatprep.subr.bf16.mxu0 0
        %867 = vmatpush2.bf16.msra.mxu0 0
        %868 = vmatprep.mubr.bf16.mxu0 0
        %869 = vmatmul.mubr.bf16.gmra.mxu0 %v828
        %v870 = vpop.f32.mrf.mxu0
        %v871 = vadd.f32 %v775, %v870
        %v872 = vpop.f32.mrf.mxu0
        %v873 = vadd.f32 %v775, %v872
        %v874 = vpop.f32.mrf.mxu0
        %v875 = vadd.f32 %v780, %v874
        %v876 = vpop.f32.mrf.mxu0
        %v877 = vadd.f32 %v780, %v876
        %878 = vmatprep.mubr.bf16.mxu0 0
        %879 = vmatmul.mubr.bf16.gmra.mxu0 %v829
        %v880 = vpop.f32.mrf.mxu0
        %v881 = vadd.f32 %v785, %v880
        %v882 = vpop.f32.mrf.mxu0
        %v883 = vadd.f32 %v785, %v882
        %v884 = vpop.f32.mrf.mxu0
        %v885 = vadd.f32 %v790, %v884
        %v886 = vpop.f32.mrf.mxu0
        %v887 = vadd.f32 %v790, %v886
        %888 = vmatprep.mubr.bf16.mxu0 0
        %889 = vmatmul.mubr.bf16.gmra.mxu0 %v830
        %v890 = vpop.f32.mrf.mxu0
        %v891 = vadd.f32 %v795, %v890
        %v892 = vpop.f32.mrf.mxu0
        %v893 = vadd.f32 %v795, %v892
        %v894 = vpop.f32.mrf.mxu0
        %v895 = vadd.f32 %v800, %v894
        %v896 = vpop.f32.mrf.mxu0
        %v897 = vadd.f32 %v800, %v896
        %898 = vmatprep.mubr.bf16.mxu0 0
        %899 = vmatmul.mubr.bf16.gmra.mxu0 %v831
        %v900 = vpop.f32.mrf.mxu0
        %v901 = vadd.f32 %v805, %v900
        %v902 = vpop.f32.mrf.mxu0
        %v903 = vadd.f32 %v805, %v902
        %v904 = vpop.f32.mrf.mxu0
        %v905 = vadd.f32 %v810, %v904
        %v906 = vpop.f32.mrf.mxu0
        %v907 = vadd.f32 %v810, %v906
        %908 = vdwg.mxu0
        %v909 = vmul.f32 %v871, 0.01
        %v910 = vmul.f32 %v873, 0.01
        %v911 = vmul.f32 %v875, 0.01
        %v912 = vmul.f32 %v877, 0.01
        %v913 = vmul.f32 %v881, 0.01
        %v914 = vmul.f32 %v883, 0.01
        %v915 = vmul.f32 %v885, 0.01
        %v916 = vmul.f32 %v887, 0.01
        %v917 = vmul.f32 %v891, 0.01
        %v918 = vmul.f32 %v893, 0.01
        %v919 = vmul.f32 %v895, 0.01
        %v920 = vmul.f32 %v897, 0.01
        %v921 = vmul.f32 %v901, 0.01
        %v922 = vmul.f32 %v903, 0.01
        %v923 = vmul.f32 %v905, 0.01
        %v924 = vmul.f32 %v907, 0.01
        %v925 = vmax.f32 %v871, %v909
        %v926 = vmax.f32 %v873, %v910
        %v927 = vmax.f32 %v875, %v911
        %v928 = vmax.f32 %v877, %v912
        %v929 = vmax.f32 %v881, %v913
        %v930 = vmax.f32 %v883, %v914
        %v931 = vmax.f32 %v885, %v915
        %v932 = vmax.f32 %v887, %v916
        %v933 = vmax.f32 %v891, %v917
        %v934 = vmax.f32 %v893, %v918
        %v935 = vmax.f32 %v895, %v919
        %v936 = vmax.f32 %v897, %v920
        %v937 = vmax.f32 %v901, %v921
        %v938 = vmax.f32 %v903, %v922
        %v939 = vmax.f32 %v905, %v923
        %v940 = vmax.f32 %v907, %v924
        %v941 = vld [vmem:[%s5] sm:$0xff]
        %v942 = vld [vmem:[%s5 + $0x8] sm:$0xff]
        %v943 = vld [vmem:[%s5 + $0x10] sm:$0xff]
        %v944 = vld [vmem:[%s5 + $0x18] sm:$0xff]
        %v945 = vld [vmem:[%s5 + $0x20] sm:$0xff]
        %v946 = vld [vmem:[%s5 + $0x28] sm:$0xff]
        %v947 = vld [vmem:[%s5 + $0x30] sm:$0xff]
        %v948 = vld [vmem:[%s5 + $0x38] sm:$0xff]
        %950 = vset.pattern.permute.xlu0 0
        %951 = vperm.xlu0 %950, %v941
        %v952 = vpop.permute.xlu0 %951
        %955 = vset.pattern.permute.xlu0 0
        %956 = vperm.xlu0 %955, %v942
        %v957 = vpop.permute.xlu0 %956
        %960 = vset.pattern.permute.xlu0 0
        %961 = vperm.xlu0 %960, %v943
        %v962 = vpop.permute.xlu0 %961
        %965 = vset.pattern.permute.xlu0 0
        %966 = vperm.xlu0 %965, %v944
        %v967 = vpop.permute.xlu0 %966
        %970 = vset.pattern.permute.xlu0 0
        %971 = vperm.xlu0 %970, %v945
        %v972 = vpop.permute.xlu0 %971
        %975 = vset.pattern.permute.xlu0 0
        %976 = vperm.xlu0 %975, %v946
        %v977 = vpop.permute.xlu0 %976
        %980 = vset.pattern.permute.xlu0 0
        %981 = vperm.xlu0 %980, %v947
        %v982 = vpop.permute.xlu0 %981
        %985 = vset.pattern.permute.xlu0 0
        %986 = vperm.xlu0 %985, %v948
        %v987 = vpop.permute.xlu0 %986
        %v989 = vmul.f32 %v925, %v952
        %v990 = vmul.f32 %v926, %v952
        %v991 = vmul.f32 %v927, %v957
        %v992 = vmul.f32 %v928, %v957
        %v993 = vmul.f32 %v929, %v962
        %v994 = vmul.f32 %v930, %v962
        %v995 = vmul.f32 %v931, %v967
        %v996 = vmul.f32 %v932, %v967
        %v997 = vmul.f32 %v933, %v972
        %v998 = vmul.f32 %v934, %v972
        %v999 = vmul.f32 %v935, %v977
        %v1000 = vmul.f32 %v936, %v977
        %v1001 = vmul.f32 %v937, %v982
        %v1002 = vmul.f32 %v938, %v982
        %v1003 = vmul.f32 %v939, %v987
        %v1004 = vmul.f32 %v940, %v987
        %v1005 = vadd.f32 %v989, %v991
        %v1006 = vadd.f32 %v1005, %v993
        %v1007 = vadd.f32 %v1006, %v995
        %v1008 = vadd.f32 %v1007, %v997
        %v1009 = vadd.f32 %v1008, %v999
        %v1010 = vadd.f32 %v1009, %v1001
        %v1011 = vadd.f32 %v1010, %v1003
        %v1012 = vrot.slane %v1011, 4
        %v1013 = vadd.f32 %v1011, %v1012
        %v1014 = vrot.slane %v1013, 2
        %v1015 = vadd.f32 %v1013, %v1014
        %v1016 = vrot.slane %v1015, 1
        %v1017 = vadd.f32 %v1015, %v1016
        %v1018 = vadd.f32 %v990, %v992
        %v1019 = vadd.f32 %v1018, %v994
        %v1020 = vadd.f32 %v1019, %v996
        %v1021 = vadd.f32 %v1020, %v998
        %v1022 = vadd.f32 %v1021, %v1000
        %v1023 = vadd.f32 %v1022, %v1002
        %v1024 = vadd.f32 %v1023, %v1004
        %v1025 = vrot.slane %v1024, 4
        %v1026 = vadd.f32 %v1024, %v1025
        %v1027 = vrot.slane %v1026, 2
        %v1028 = vadd.f32 %v1026, %v1027
        %v1029 = vrot.slane %v1028, 1
        %v1030 = vadd.f32 %v1028, %v1029
        %v1033 = vcombine.low %v1017, %v1030
        %v1035 = vunpack.c.l.s4 1966171168
        %v1036 = vunpack.c.0.s8 %v1035
        %v1037 = vlaneseq
        %v1038 = vshrl.u32 %v1037, 7
        %v1039 = vsub.s32 %v1036, %v1038
        %v1040 = vrot.slane %v1033, %v1039
        %v1042 = vunpack.c.l.s4 1966171168
        %v1043 = vunpack.c.0.s8 %v1042
        %v1044 = vlaneseq
        %v1045 = vshrl.u32 %v1044, 7
        %v1046 = vsub.s32 %v1043, %v1045
        %v1047 = vrot.slane %v1040, %v1046
        %v1049 = vlaneseq
        %vm1050 = vcmp.ge.s32.totalorder %v1049, 0
        %vm1051 = vcmp.lt.s32.totalorder %v1049, 256
        %vm1052 = vmand %vm1050, %vm1051
        %1053 = vst.msk [vmem:[%s257] sm:$0x3] %vm1052, %v1047
        %s1054 = sand.u32 %s159, 1
        %s1055 = scalar_lea.sflag [#allocation3], %s1054
        %s1056 = sand.u32 %s159, 1
        %s1057 = smul.addr %s1056, 2
        %s1058 = scalar_lea.vmem [#allocation2], %s1057
        // Predicated region
        $region45: #{tpu_custom_call.1} parent=43 // pred_check
          %p1059 = pneg %p169
        $region46: #{tpu_custom_call.1} parent=43 // pred_check_branch
          %1061 = sbr.rel (%p1059) target = $region48
        $region47: #{tpu_custom_call.1} parent=43 // pred_region
          %s1062 = smul.u32 2, %s20
          %s1063 = ssub.s32 3, %s1062
          %p1064 = scmp.lt.s32.totalorder %s1063, 2
          %s1065 = scalar_select %p1064, %s1063, 2
          %s1066 = smul.u32 16, %s1065
          %s1068 = ssub.s32 32, %s1066
          %1069 = vsyncadd %s1055, %s1068
          %p1070 = scmp.ne.s32.totalorder 0, %s1066
          %s1071 = smul.addr %s1062, 16
          %s1072 = scalar_lea.hbm %s6, %s1071
          %s1073 = sshll.u32 %s1065, 4
          %s1074 = sshll.u32 %s1058, 4
          %s1075 = int_to_ptr.vmem [resolvable:$true] %s1074
          %1077 = dma.vmem_to_hbm [thread:$0]  (%p1070), %s1075, %s1073, %s1072, %s1055
        $region48: #{tpu_custom_call.1} parent=43 // pred_fallthru
          _
      $region44: #{tpu_custom_call.1} parent=5 // pred_fallthru
        _
      %p1078 = scmp.le.s32.totalorder 2, %s15
      // Predicated region
      $region49: #{tpu_custom_call.1} parent=5 // pred_check
        %p1079 = pneg %p1078
      $region50: #{tpu_custom_call.1} parent=5 // pred_check_branch
        %1081 = sbr.rel (%p1079) target = $region52
      $region51: #{tpu_custom_call.1} parent=5 // pred_region
        %s1082 = ssub.s32 %s15, 2
        // Predicated region
        $region53: #{tpu_custom_call.1} parent=51 // pred_check
          %p1083 = pneg %p175
        $region54: #{tpu_custom_call.1} parent=51 // pred_check_branch
          %1085 = sbr.rel (%p1083) target = $region56
        $region55: #{tpu_custom_call.1} parent=51 // pred_region
          %s1086 = sand.u32 %s160, 1
          %s1087 = scalar_lea.sflag [#allocation3], %s1086
          %s1088 = sand.u32 %s160, 1
          %s1089 = smul.addr %s1088, 2
          %s1090 = scalar_lea.vmem [#allocation2], %s1089
          %1091 = dma.done %s1087, 32
        $region56: #{tpu_custom_call.1} parent=51 // pred_fallthru
          _
      $region52: #{tpu_custom_call.1} parent=5 // pred_fallthru
        _
    $region6: #{tpu_custom_call.1} parent=1 // loop_footer
      %s19 = sadd.s32 1, %s15
    $region7: #{tpu_custom_call.1} parent=1 // loop_footer_branch
      %14 = sbr.rel target = $region3
    $region8: #{tpu_custom_call.1} parent=1 // loop_exit
      _
    %1092 = vsyncpa [#allocation3], 1
    %s1093 = scalar_lea.sflag [#allocation3], 1
    %1094 = vsyncpa %s1093, 1

</llo_original>
